<compile_context>
chip_gen: v5e
topology: v5e:2x2
jax: 0.10.0
libtpu: 0.0.40
codegen_flags: <defaults>
</compile_context>

<pallas_src>
import functools

import jax
import jax.numpy as jnp
from jax.experimental import pallas as pl
from jax.experimental.pallas import tpu as pltpu


def _embedding_head_kernel_selector(x_ref, w_ref, b_ref, m_ref, o_ref):
    # x_ref : (1, C_in, TT)   activation tile in the original NCL layout
    # w_ref : (C_out, C_in)   Conv1d(k=1) weight (resident)
    # b_ref : (C_out, 1)      bias (resident)
    # m_ref : (C_out, C_out)  block-diagonal 0/1 same-feature selector (resident)
    # o_ref : (1, C_out, TT)  lane-dense output tile (time on lanes)
    x = x_ref[0]                                                  # (C_in, TT)

    # Conv1d(kernel_size=1) == per-position matmul in canonical MXU (M,K)@(K,N)
    # orientation; no transposed-LHS contraction, no wrapper-side HBM transpose.
    y = jnp.dot(w_ref[...], x, preferred_element_type=jnp.float32)  # (C_out, TT)
    s = jax.nn.sigmoid(y + b_ref[...])                               # (C_out, TT)

    # Per-feature sum of squares without leaving the (C_out, TT) lane layout:
    # M @ (s*s), M[i,j] = 1 iff rows i,j belong to the same embedding feature.
    # Runs on the otherwise-idle MXU.
    denom = jnp.dot(m_ref[...], s * s, preferred_element_type=jnp.float32)

    # Plain normalization (no eps) to match the reference `x / x.norm(...)`.
    o_ref[0] = (s * jax.lax.rsqrt(denom)).astype(o_ref.dtype)


def _embedding_head_kernel_groupsum(x_ref, w_ref, b_ref, o_ref, *,
                                    embd_feature, embd_dim):
    # Fallback for large C_out: per-group reshape + sublane-group sum instead of
    # the O(C_out^2) selector matmul (quadratic VMEM/flops).
    x = x_ref[0]                                                  # (C_in, TT)
    y = jnp.dot(w_ref[...], x, preferred_element_type=jnp.float32)  # (C_out, TT)
    s = jax.nn.sigmoid(y + b_ref[...])
    tt = s.shape[-1]
    ss = (s * s).reshape(embd_feature, embd_dim, tt)
    group = ss.sum(axis=1, keepdims=True)                        # (F, 1, TT)
    denom = jnp.broadcast_to(group, (embd_feature, embd_dim, tt))
    denom = denom.reshape(embd_feature * embd_dim, tt)
    o_ref[0] = (s * jax.lax.rsqrt(denom)).astype(o_ref.dtype)


def embedding_head_forward(x, weight, bias, *, embd_feature, embd_dim,
                           time_tile=None, x_dtype=jnp.float32):
    """x: (B, C_in, T) float32 (PyTorch NCL). Returns (B, F, T, D) float32."""
    B, C_in, T = x.shape
    C_out = embd_feature * embd_dim
    assert weight.shape == (C_out, C_in, 1)
    assert bias.shape == (C_out,)

    # Time tile: full T for T <= 2048, else a lane-aligned tile (sweepable).
    if time_tile is None:
        TT = T if T <= 2048 else 1024
    else:
        TT = min(int(time_tile), T)
    assert TT == T or TT % 128 == 0, \
        "time_tile must be a multiple of 128 or the full T"
    num_t = pl.cdiv(T, TT)

    # Parameter-side reshapes only (negligible traffic). Optional bf16 on the
    # dominant activation stream (matmul still accumulates in f32).
    w2 = weight[:, :, 0].astype(x_dtype)                          # (C_out, C_in)
    x_in = x.astype(x_dtype)
    b2 = bias.reshape(C_out, 1).astype(jnp.float32)               # (C_out, 1)

    use_selector = C_out <= 512
    if use_selector:
        fidx = jnp.arange(C_out, dtype=jnp.int32) // embd_dim
        sel = (fidx[:, None] == fidx[None, :]).astype(jnp.float32)  # (C_out, C_out)
        kernel = _embedding_head_kernel_selector
        extra_args = (sel,)
        extra_specs = [pl.BlockSpec((C_out, C_out), lambda t, b: (0, 0))]
    else:
        kernel = functools.partial(_embedding_head_kernel_groupsum,
                                   embd_feature=embd_feature, embd_dim=embd_dim)
        extra_args = ()
        extra_specs = []

    # VMEM budget: double-buffered x/out tiles + resident params + headroom,
    # capped at 48 MiB so v7x (64 MiB physical) keeps room for Mosaic scratch.
    rup = lambda n, m: ((n + m - 1) // m) * m
    xb = jnp.dtype(x_dtype).itemsize
    lane_tt = rup(TT, 128)
    x_tile = rup(C_in, 8) * lane_tt * xb
    o_tile = rup(C_out, 8) * lane_tt * 4
    resident = (rup(C_out, 8) * rup(C_in, 128) * xb          # weight
                + rup(C_out, 8) * 128 * 4                    # bias
                + (rup(C_out, 8) * rup(C_out, 128) * 4 if use_selector else 0))
    vmem_limit = min(max(2 * (x_tile + o_tile) + resident + (4 << 20), 8 << 20),
                     48 << 20)

    cost = pl.CostEstimate(
        flops=2 * B * T * C_out * (C_in + (C_out if use_selector else 1)),
        transcendentals=2 * B * T * C_out,
        bytes_accessed=(xb * B * C_in * T + xb * C_in * C_out
                        + 4 * (C_out + B * C_out * T
                               + (C_out * C_out if use_selector else 0))),
    )

    # Grid: (num_t, B) with the (usually larger) time axis first so the
    # "parallel" sharding across v7x's two TensorCores stays balanced.
    out_flat = pl.pallas_call(
        kernel,
        out_shape=jax.ShapeDtypeStruct((B, C_out, T), jnp.float32),
        grid=(num_t, B),
        in_specs=[
            pl.BlockSpec((1, C_in, TT), lambda t, b: (b, 0, t)),   # x (NCL tile)
            pl.BlockSpec((C_out, C_in), lambda t, b: (0, 0)),      # weight (resident)
            pl.BlockSpec((C_out, 1), lambda t, b: (0, 0)),         # bias (resident)
        ] + extra_specs,
        out_specs=pl.BlockSpec((1, C_out, TT), lambda t, b: (b, 0, t)),
        compiler_params=pltpu.CompilerParams(
            dimension_semantics=("parallel", "parallel"),
            vmem_limit_bytes=int(vmem_limit),
        ),
        cost_estimate=cost,
    )(x_in, w2, b2, *extra_args)

    # Layout plumbing in the wrapper: (B, C_out, T) -> unflatten -> transpose
    # == PyTorch .unflatten(-2, (F, D)).transpose(-1, -2). One cheap XLA pass
    # over the small output tensor; keeps the kernel's output lane-dense.
    out = out_flat.reshape(B, embd_feature, embd_dim, T)
    out = jnp.transpose(out, (0, 1, 3, 2))                         # (B, F, T, D)
    return out


def _reference_forward(x, weight, bias, *, embd_feature, embd_dim):
    """Pure-JAX reference matching the PyTorch semantics."""
    y = jnp.einsum("oc,bct->bot", weight[:, :, 0], x) + bias[None, :, None]
    B, _, T = y.shape
    y = y.reshape(B, embd_feature, embd_dim, T)            # unflatten(-2, (F, D))
    y = jnp.transpose(y, (0, 1, 3, 2))                     # transpose(-1, -2)
    s = jax.nn.sigmoid(y)
    return s / jnp.linalg.norm(s, axis=-1, keepdims=True)


if __name__ == "__main__":
    # Small shapes consistent with the module; T chosen to exercise the
    # multi-tile grid path (time_tile=128 -> grid = (2, 2)).
    B = 2
    in_feature = 32
    embd_feature = 4
    embd_dim = 8
    T = 256

    key = jax.random.PRNGKey(0)
    kx, kw, kb = jax.random.split(key, 3)

    x = jax.random.normal(kx, (B, in_feature, T), dtype=jnp.float32)
    weight = jax.random.normal(
        kw, (embd_feature * embd_dim, in_feature, 1), dtype=jnp.float32
    ) * 0.1
    bias = jax.random.normal(kb, (embd_feature * embd_dim,), dtype=jnp.float32) * 0.1

    out = embedding_head_forward(
        x, weight, bias, embd_feature=embd_feature, embd_dim=embd_dim,
        time_tile=128,
    )
    out = jax.block_until_ready(out)

    ref = _reference_forward(
        x, weight, bias, embd_feature=embd_feature, embd_dim=embd_dim
    )
    assert out.shape == (B, embd_feature, T, embd_dim)
    assert jnp.allclose(out, ref, atol=5e-5, rtol=5e-5), float(
        jnp.max(jnp.abs(out - ref)))

    print("KERNEL_OK")
</pallas_src>

<mosaic_0001>
module attributes {stable_mosaic.version = 11 : i64} {
  func.func @_embedding_head_kernel_selector(%arg0: i32, %arg1: i32, %arg2: memref<1x32x128xf32, #tpu.memory_space<vmem>>, %arg3: memref<32x32xf32, #tpu.memory_space<vmem>>, %arg4: memref<32x1xf32, #tpu.memory_space<vmem>>, %arg5: memref<32x32xf32, #tpu.memory_space<vmem>>, %arg6: memref<1x32x128xf32, #tpu.memory_space<vmem>>) attributes {dimension_semantics = [#tpu.dimension_semantics<parallel>, #tpu.dimension_semantics<parallel>], iteration_bounds = array<i64: 2, 2>, scalar_prefetch = 0 : i64, scratch_operands = 0 : i64, tpu.core_type = #tpu.core_type<tc>, window_params = [{transform_indices = @transform_0, window_bounds = array<i64: 1, 32, 128>}, {pipeline_mode = #tpu.pipeline_mode<synchronous>, transform_indices = @transform_1, window_bounds = array<i64: 32, 32>}, {pipeline_mode = #tpu.pipeline_mode<synchronous>, transform_indices = @transform_2, window_bounds = array<i64: 32, 1>}, {pipeline_mode = #tpu.pipeline_mode<synchronous>, transform_indices = @transform_3, window_bounds = array<i64: 32, 32>}, {transform_indices = @transform_4, window_bounds = array<i64: 1, 32, 128>}]} {
    %c0 = arith.constant 0 : index
    %c0_0 = arith.constant 0 : index
    %c0_1 = arith.constant 0 : index
    %0 = vector.load %arg2[%c0, %c0_0, %c0_1] : memref<1x32x128xf32, #tpu.memory_space<vmem>>, vector<1x32x128xf32>
    %1 = vector.shape_cast %0 : vector<1x32x128xf32> to vector<32x128xf32>
    %c0_2 = arith.constant 0 : index
    %c0_3 = arith.constant 0 : index
    %2 = vector.load %arg3[%c0_2, %c0_3] : memref<32x32xf32, #tpu.memory_space<vmem>>, vector<32x32xf32>
    %cst = arith.constant dense<0.000000e+00> : vector<32x128xf32>
    %3 = tpu.matmul %2, %1, %cst {dimension_numbers = #tpu.dot_dimension_numbers<[1], [0], [0], [1], [0, 0, 1, 1], [], []>} : vector<32x32xf32>, vector<32x128xf32>, vector<32x128xf32> -> vector<32x128xf32>
    %c0_4 = arith.constant 0 : index
    %c0_5 = arith.constant 0 : index
    %4 = vector.load %arg4[%c0_4, %c0_5] : memref<32x1xf32, #tpu.memory_space<vmem>>, vector<32x1xf32>
    %5 = vector.broadcast %4 : vector<32x1xf32> to vector<32x128xf32>
    %6 = arith.addf %3, %5 : vector<32x128xf32>
    %7 = arith.negf %6 : vector<32x128xf32>
    %8 = math.exp %7 : vector<32x128xf32>
    %cst_6 = arith.constant 1.000000e+00 : f32
    %9 = vector.broadcast %cst_6 : f32 to vector<32x128xf32>
    %10 = arith.addf %9, %8 : vector<32x128xf32>
    %11 = arith.divf %9, %10 : vector<32x128xf32>
    %c0_7 = arith.constant 0 : index
    %c0_8 = arith.constant 0 : index
    %12 = vector.load %arg5[%c0_7, %c0_8] : memref<32x32xf32, #tpu.memory_space<vmem>>, vector<32x32xf32>
    %13 = arith.mulf %11, %11 : vector<32x128xf32>
    %cst_9 = arith.constant dense<0.000000e+00> : vector<32x128xf32>
    %14 = tpu.matmul %12, %13, %cst_9 {dimension_numbers = #tpu.dot_dimension_numbers<[1], [0], [0], [1], [0, 0, 1, 1], [], []>} : vector<32x32xf32>, vector<32x128xf32>, vector<32x128xf32> -> vector<32x128xf32>
    %15 = math.rsqrt %14 : vector<32x128xf32>
    %16 = arith.mulf %11, %15 : vector<32x128xf32>
    %c0_10 = arith.constant 0 : index
    %c0_11 = arith.constant 0 : index
    %c0_12 = arith.constant 0 : index
    %17 = vector.load %arg6[%c0_10, %c0_11, %c0_12] : memref<1x32x128xf32, #tpu.memory_space<vmem>>, vector<1x32x128xf32>
    %18 = vector.shape_cast %17 : vector<1x32x128xf32> to vector<32x128xf32>
    %19 = vector.shape_cast %16 : vector<32x128xf32> to vector<1x32x128xf32>
    tpu.vector_store %arg6[%c0_10, %c0_11, %c0_12], %19 {strides = array<i32>} : memref<1x32x128xf32, #tpu.memory_space<vmem>>, vector<1x32x128xf32>,
    return
  }
  func.func @transform_0(%arg0: i32, %arg1: i32) -> (i32, i32, i32) {
    %c0_i32 = arith.constant 0 : i32
    %c0_i32_0 = arith.constant 0 : i32
    return %arg1, %c0_i32, %arg0 : i32, i32, i32
  }
  func.func @transform_1(%arg0: i32, %arg1: i32) -> (i32, i32) {
    %c0_i32 = arith.constant 0 : i32
    %c0_i32_0 = arith.constant 0 : i32
    %c0_i32_1 = arith.constant 0 : i32
    return %c0_i32, %c0_i32_0 : i32, i32
  }
  func.func @transform_2(%arg0: i32, %arg1: i32) -> (i32, i32) {
    %c0_i32 = arith.constant 0 : i32
    %c0_i32_0 = arith.constant 0 : i32
    %c0_i32_1 = arith.constant 0 : i32
    return %c0_i32, %c0_i32_0 : i32, i32
  }
  func.func @transform_3(%arg0: i32, %arg1: i32) -> (i32, i32) {
    %c0_i32 = arith.constant 0 : i32
    %c0_i32_0 = arith.constant 0 : i32
    %c0_i32_1 = arith.constant 0 : i32
    return %c0_i32, %c0_i32_0 : i32, i32
  }
  func.func @transform_4(%arg0: i32, %arg1: i32) -> (i32, i32, i32) {
    %c0_i32 = arith.constant 0 : i32
    %c0_i32_0 = arith.constant 0 : i32
    return %arg1, %c0_i32, %arg0 : i32, i32, i32
  }
}

</mosaic_0001>

<llo_original>
// kernel: tpu_custom_call.1
$region0: #{tpu_custom_call.1}
  #allocation0 [shape = 'u32[]', space=smem, size = 0x4, offset = 0x4, fixed_abs, tag = 'smem constant byte address 0x4 - core index']
  #allocation1 [shape = 'u32[72,128]{1,0:T(1,128)}', space=vmem, size = 0x9000, scoped, tag = 'internal scratch']
  %s0 = inlined_call_operand.hbm [shape: f32[2,32,256], index: 0, kind: input, shape index: {}]
  %s1 = inlined_call_operand.vmem [shape: f32[32,32], index: 1, kind: input, shape index: {}]
  %s2 = inlined_call_operand.vmem [shape: f32[32,1], index: 2, kind: input, shape index: {}]
  %s3 = inlined_call_operand.hbm [shape: f32[32,32], index: 3, kind: input, shape index: {}]
  %s4 = inlined_call_operand.hbm [shape: f32[2,32,256], index: 4, kind: output, shape index: {}]
  %s5 = sld [smem:[#allocation0]]
  $region57: #{tpu_custom_call.1} parent=0
    _
  %s7 = ssub.s32 1, %s5
  %s8 = scalar_select 0, %s7, %s5
  $region1: #{tpu_custom_call.1} parent=0
    #allocation2 [shape = 'u8[32768]{0}', space=vmem, size = 0x8000, scoped, tag = 'input window, operand 0']
    #allocation3 [shape = 's32[2]{0}', space=sflag, size = 0x8, scoped, tag = 'scoped memory for tpu_custom_call.1']
    #allocation4 [shape = 's32[2]{0}', space=sflag, size = 0x8, scoped, tag = 'scoped memory for tpu_custom_call.1']
    #allocation5 [shape = 'u8[16384]{0}', space=vmem, size = 0x4000, scoped, tag = 'input window, operand 3, single buffered']
    #allocation6 [shape = 's32[1]{0}', space=sflag, size = 0x4, scoped, tag = 'scoped memory for tpu_custom_call.1']
    #allocation7 [shape = 'u8[32768]{0}', space=vmem, size = 0x8000, scoped, tag = 'output window, operand 0']
    %9 = vsyncpa [#allocation3], 0
    %s10 = scalar_lea.sflag [#allocation3], 1
    %11 = vsyncpa %s10, 0
    %12 = vsyncpa [#allocation6], 0
    %13 = vsyncpa [#allocation4], 0
    %s14 = scalar_lea.sflag [#allocation4], 1
    %15 = vsyncpa %s14, 0
    loop: start=0, step=1, limit=6
    $region2: #{tpu_custom_call.1} parent=1 // loop_pre_header
      _
    $region3: #{tpu_custom_call.1} parent=1 // loop_header
      %s17 = sphi 0, %s21
      %p18 = scmp.ge.s32.totalorder %s17, 6
      %s24 = sphi 0, %s36
      %s25 = sphi 0, %s32
      %s26 = sphi 0, %s24
      %s27 = sphi 0, %s25
      %s28 = sphi 0, %s26
      %s29 = sphi 0, %s27
      %s41 = sphi 0, %s43
      %s44 = sphi 0, %s41
      %s45 = sphi 0, %s44
      %s61 = sphi 0, %s45
      %s65 = sphi 0, %s65
      %s67 = sphi 0, %s65
      %s68 = sphi 0, %s67
      %s82 = sphi 0, %s68
      %s86 = sphi 0, %s86
      %s88 = sphi 0, %s86
      %s89 = sphi 0, %s88
      %s103 = sphi 0, %s89
      %s107 = sphi 0, %s107
      %s109 = sphi 0, %s107
      %s110 = sphi 0, %s109
      %s124 = sphi 0, %s110
      %s132 = sphi 0, %s134
      %s135 = sphi 0, %s132
      %s136 = sphi 0, %s135
      %s152 = sphi 0, %s136
    $region4: #{tpu_custom_call.1} parent=1 // loop_header_branch
      %20 = sbr.rel (%p18) target = $region8
    $region5: #{tpu_custom_call.1} parent=1 // loop_body
      %s22 = ssub.s32 %s17, 1
      %s23 = ssub.s32 %s17, 2
      %s30 = sadd.s32 1, %s25
      %p31 = scmp.ge.s32.totalorder %s30, 2
      %s32 = scalar_select %p31, 0, %s30
      %s33 = sadd.s32 1, %s24
      %s34 = scalar_select %p31, %s33, %s24
      %p35 = scmp.ge.s32.totalorder %s34, 2
      %s36 = scalar_select %p35, 0, %s34
      %s37 = ssub.s32 %s25, %s32
      %s38 = ssub.s32 %s24, %s36
      %s39 = sor.u32 %s37, %s38
      %p40 = scmp.eq.s32.totalorder %s39, 0
      %s42 = sadd.s32 %s41, 1
      %s43 = scalar_select %p40, %s41, %s42
      %p46 = pneg %p40
      %p47 = scmp.eq.s32.totalorder %s17, 3
      %p48 = por %p46, %p47
      %p49 = scmp.ne.s32.totalorder %s41, %s44
      %p50 = scmp.eq.s32.totalorder %s17, 0
      %p51 = por %p49, %p50
      %p52 = scmp.ne.s32.totalorder %s41, %s44
      %p53 = scmp.eq.s32.totalorder %s22, 3
      %p54 = por %p52, %p53
      %p55 = scmp.ne.s32.totalorder %s44, %s45
      %p56 = scmp.eq.s32.totalorder %s22, 0
      %p57 = por %p55, %p56
      %p58 = scmp.ne.s32.totalorder %s44, %s45
      %p59 = scmp.eq.s32.totalorder %s23, 3
      %p60 = por %p58, %p59
      %p62 = scmp.ne.s32.totalorder %s45, %s61
      %p63 = scmp.eq.s32.totalorder %s23, 0
      %p64 = por %p62, %p63
      %s66 = sadd.s32 %s65, 1
      %p69 = scmp.eq.s32.totalorder %s17, 3
      %p70 = scmp.ne.s32.totalorder %s65, %s67
      %p71 = scmp.eq.s32.totalorder %s17, 0
      %p72 = por %p70, %p71
      %p73 = scmp.ne.s32.totalorder %s65, %s67
      %p74 = scmp.eq.s32.totalorder %s22, 3
      %p75 = por %p73, %p74
      %p76 = scmp.ne.s32.totalorder %s67, %s68
      %p77 = scmp.eq.s32.totalorder %s22, 0
      %p78 = por %p76, %p77
      %p79 = scmp.ne.s32.totalorder %s67, %s68
      %p80 = scmp.eq.s32.totalorder %s23, 3
      %p81 = por %p79, %p80
      %p83 = scmp.ne.s32.totalorder %s68, %s82
      %p84 = scmp.eq.s32.totalorder %s23, 0
      %p85 = por %p83, %p84
      %s87 = sadd.s32 %s86, 1
      %p90 = scmp.eq.s32.totalorder %s17, 3
      %p91 = scmp.ne.s32.totalorder %s86, %s88
      %p92 = scmp.eq.s32.totalorder %s17, 0
      %p93 = por %p91, %p92
      %p94 = scmp.ne.s32.totalorder %s86, %s88
      %p95 = scmp.eq.s32.totalorder %s22, 3
      %p96 = por %p94, %p95
      %p97 = scmp.ne.s32.totalorder %s88, %s89
      %p98 = scmp.eq.s32.totalorder %s22, 0
      %p99 = por %p97, %p98
      %p100 = scmp.ne.s32.totalorder %s88, %s89
      %p101 = scmp.eq.s32.totalorder %s23, 3
      %p102 = por %p100, %p101
      %p104 = scmp.ne.s32.totalorder %s89, %s103
      %p105 = scmp.eq.s32.totalorder %s23, 0
      %p106 = por %p104, %p105
      %s108 = sadd.s32 %s107, 1
      %p111 = scmp.eq.s32.totalorder %s17, 3
      %p112 = scmp.ne.s32.totalorder %s107, %s109
      %p113 = scmp.eq.s32.totalorder %s17, 0
      %p114 = por %p112, %p113
      %p115 = scmp.ne.s32.totalorder %s107, %s109
      %p116 = scmp.eq.s32.totalorder %s22, 3
      %p117 = por %p115, %p116
      %p118 = scmp.ne.s32.totalorder %s109, %s110
      %p119 = scmp.eq.s32.totalorder %s22, 0
      %p120 = por %p118, %p119
      %p121 = scmp.ne.s32.totalorder %s109, %s110
      %p122 = scmp.eq.s32.totalorder %s23, 3
      %p123 = por %p121, %p122
      %p125 = scmp.ne.s32.totalorder %s110, %s124
      %p126 = scmp.eq.s32.totalorder %s23, 0
      %p127 = por %p125, %p126
      %s128 = ssub.s32 %s25, %s32
      %s129 = ssub.s32 %s24, %s36
      %s130 = sor.u32 %s128, %s129
      %p131 = scmp.eq.s32.totalorder %s130, 0
      %s133 = sadd.s32 %s132, 1
      %s134 = scalar_select %p131, %s132, %s133
      %p137 = pneg %p131
      %p138 = scmp.eq.s32.totalorder %s17, 3
      %p139 = por %p137, %p138
      %p140 = scmp.ne.s32.totalorder %s132, %s135
      %p141 = scmp.eq.s32.totalorder %s17, 0
      %p142 = por %p140, %p141
      %p143 = scmp.ne.s32.totalorder %s132, %s135
      %p144 = scmp.eq.s32.totalorder %s22, 3
      %p145 = por %p143, %p144
      %p146 = scmp.ne.s32.totalorder %s135, %s136
      %p147 = scmp.eq.s32.totalorder %s22, 0
      %p148 = por %p146, %p147
      %p149 = scmp.ne.s32.totalorder %s135, %s136
      %p150 = scmp.eq.s32.totalorder %s23, 3
      %p151 = por %p149, %p150
      %p153 = scmp.ne.s32.totalorder %s136, %s152
      %p154 = scmp.eq.s32.totalorder %s23, 0
      %p155 = por %p153, %p154
      %p156 = scmp.le.s32.totalorder 1, %s17
      %p157 = scmp.lt.s32.totalorder %s17, 5
      %p158 = pnand %p156, %p157
      %p159 = pneg %p158
      // Predicated region
      $region9: #{tpu_custom_call.1} parent=5 // pred_check
        _
      $region10: #{tpu_custom_call.1} parent=5 // pred_check_branch
        %161 = sbr.rel (%p158) target = $region12
      $region11: #{tpu_custom_call.1} parent=5 // pred_region
        %s162 = ssub.s32 %s17, 1
        // Predicated region
        $region13: #{tpu_custom_call.1} parent=11 // pred_check
          %p163 = pneg %p78
        $region14: #{tpu_custom_call.1} parent=11 // pred_check_branch
          %165 = sbr.rel (%p163) target = $region16
        $region15: #{tpu_custom_call.1} parent=11 // pred_region
          _
        $region16: #{tpu_custom_call.1} parent=11 // pred_fallthru
          _
        // Predicated region
        $region17: #{tpu_custom_call.1} parent=11 // pred_check
          %p166 = pneg %p99
        $region18: #{tpu_custom_call.1} parent=11 // pred_check_branch
          %168 = sbr.rel (%p166) target = $region20
        $region19: #{tpu_custom_call.1} parent=11 // pred_region
          _
        $region20: #{tpu_custom_call.1} parent=11 // pred_fallthru
          _
        // Predicated region
        $region21: #{tpu_custom_call.1} parent=11 // pred_check
          %p169 = pneg %p120
        $region22: #{tpu_custom_call.1} parent=11 // pred_check_branch
          %171 = sbr.rel (%p169) target = $region24
        $region23: #{tpu_custom_call.1} parent=11 // pred_region
          %173 = vsyncadd [#allocation6], 0
          %s174 = sshll.u32 %s3, 4
          %s175 = int_to_ptr.hbm [resolvable:$true] %s174
          %s176 = sshll.u32 [#allocation5], 4
          %s177 = int_to_ptr.vmem [resolvable:$true] %s176
          %182 = dma.hbm_to_vmem [thread:$0]  %s175, 512, %s177, [#allocation6], 128, 128, 8
        $region24: #{tpu_custom_call.1} parent=11 // pred_fallthru
          _
      $region12: #{tpu_custom_call.1} parent=5 // pred_fallthru
        _
      %p183 = scmp.lt.s32.totalorder %s17, 4
      // Predicated region
      $region25: #{tpu_custom_call.1} parent=5 // pred_check
        %p184 = pneg %p183
      $region26: #{tpu_custom_call.1} parent=5 // pred_check_branch
        %186 = sbr.rel (%p184) target = $region28
      $region27: #{tpu_custom_call.1} parent=5 // pred_region
        // Predicated region
        $region29: #{tpu_custom_call.1} parent=27 // pred_check
          %p187 = pneg %p51
        $region30: #{tpu_custom_call.1} parent=27 // pred_check_branch
          %189 = sbr.rel (%p187) target = $region32
        $region31: #{tpu_custom_call.1} parent=27 // pred_region
          %s190 = sand.u32 %s41, 1
          %s191 = scalar_lea.sflag [#allocation3], %s190
          %s192 = sand.u32 %s41, 1
          %s193 = smul.addr %s192, 32
          %s194 = scalar_lea.vmem [#allocation2], %s193
          %196 = vsyncadd %s191, 0
          %s197 = smul.addr %s25, 8
          %s198 = sadd.s32 %s24, %s197
          %s199 = smul.addr %s198, 8
          %s200 = scalar_lea.hbm %s0, %s199
          %s201 = sshll.u32 %s200, 4
          %s202 = int_to_ptr.hbm [resolvable:$true] %s201
          %s203 = sshll.u32 %s194, 4
          %s204 = int_to_ptr.vmem [resolvable:$true] %s203
          %209 = dma.hbm_to_vmem [thread:$0]  %s202, 512, %s204, %s191, 256, 128, 8
        $region32: #{tpu_custom_call.1} parent=27 // pred_fallthru
          _
      $region28: #{tpu_custom_call.1} parent=5 // pred_fallthru
        _
      %p210 = scmp.le.s32.totalorder 1, %s17
      %p211 = scmp.lt.s32.totalorder %s17, 5
      %p212 = pnand %p210, %p211
      %p213 = pneg %p212
      // Predicated region
      $region33: #{tpu_custom_call.1} parent=5 // pred_check
        _
      $region34: #{tpu_custom_call.1} parent=5 // pred_check_branch
        %215 = sbr.rel (%p212) target = $region36
      $region35: #{tpu_custom_call.1} parent=5 // pred_region
        %s216 = ssub.s32 %s17, 1
        %s217 = sand.u32 %s44, 1
        %s218 = scalar_lea.sflag [#allocation3], %s217
        %s219 = sand.u32 %s44, 1
        %s220 = smul.addr %s219, 32
        %s221 = scalar_lea.vmem [#allocation2], %s220
        // Predicated region
        $region37: #{tpu_custom_call.1} parent=35 // pred_check
          %p222 = pneg %p57
        $region38: #{tpu_custom_call.1} parent=35 // pred_check_branch
          %224 = sbr.rel (%p222) target = $region40
        $region39: #{tpu_custom_call.1} parent=35 // pred_region
          %226 = dma.done %s218, 512
        $region40: #{tpu_custom_call.1} parent=35 // pred_fallthru
          _
        // Predicated region
        $region41: #{tpu_custom_call.1} parent=35 // pred_check
          %p227 = pneg %p120
        $region42: #{tpu_custom_call.1} parent=35 // pred_check_branch
          %229 = sbr.rel (%p227) target = $region44
        $region43: #{tpu_custom_call.1} parent=35 // pred_region
          %231 = dma.done [#allocation6], 512
        $region44: #{tpu_custom_call.1} parent=35 // pred_fallthru
          _
        %s232 = sand.u32 %s44, 1
        %s233 = scalar_lea.sflag [#allocation3], %s232
        %s234 = sand.u32 %s44, 1
        %s235 = smul.addr %s234, 32
        %s236 = scalar_lea.vmem [#allocation2], %s235
        %p237 = pneg %p57
        %p238 = pneg %p54
        %p239 = pneg %p78
        %p240 = pneg %p75
        %p241 = pneg %p99
        %p242 = pneg %p96
        %p243 = pneg %p120
        %p244 = pneg %p117
        %p245 = pneg %p148
        %p246 = pneg %p145
        %s247 = sand.u32 %s135, 1
        %s248 = scalar_lea.sflag [#allocation4], %s247
        %s249 = sand.u32 %s135, 1
        %s250 = smul.addr %s249, 32
        %s251 = scalar_lea.vmem [#allocation7], %s250
        %v252 = vld [vmem:[%s221] sm:$0xff]
        %v253 = vld [vmem:[%s221 + $0x8] sm:$0xff]
        %v254 = vld [vmem:[%s221 + $0x10] sm:$0xff]
        %v255 = vld [vmem:[%s221 + $0x18] sm:$0xff]
        %v256 = vld [vmem:[%s1] sm:$0xff]
        %v257 = vld [vmem:[%s1 + $0x8] sm:$0xff]
        %v258 = vld [vmem:[%s1 + $0x10] sm:$0xff]
        %v259 = vld [vmem:[%s1 + $0x18] sm:$0xff]
        %v260 = vld [vmem:[%s2] sm:$0xff]
        %v261 = vld [vmem:[%s2 + $0x8] sm:$0xff]
        %v262 = vld [vmem:[%s2 + $0x10] sm:$0xff]
        %v263 = vld [vmem:[%s2 + $0x18] sm:$0xff]
        %265 = vset.pattern.permute.xlu0 0
        %266 = vperm.xlu0 %265, %v260
        %v267 = vpop.permute.xlu0 %266
        %270 = vset.pattern.permute.xlu0 0
        %271 = vperm.xlu0 %270, %v261
        %v272 = vpop.permute.xlu0 %271
        %275 = vset.pattern.permute.xlu0 0
        %276 = vperm.xlu0 %275, %v262
        %v277 = vpop.permute.xlu0 %276
        %280 = vset.pattern.permute.xlu0 0
        %281 = vperm.xlu0 %280, %v263
        %v282 = vpop.permute.xlu0 %281
        %vm284 = vcmask 261120
        %v286 = vsel %vm284, %v256, 0
        %v289 = vsel %vm284, %v257, 0
        %v292 = vsel %vm284, %v258, 0
        %v295 = vsel %vm284, %v259, 0
        %297 = vmatpush.msra.mxu0 0.0
        %298 = vmatpush.msra.mxu0 0.0
        %299 = vmatpush.msra.mxu0 0.0
        %300 = vmatpush.msra.mxu0 0.0
        %301 = vmatpush.msra.mxu0 0.0
        %302 = vmatpush.msra.mxu0 0.0
        %303 = vmatpush.msra.mxu0 0.0
        %304 = vmatpush.msra.mxu0 0.0
        %305 = vmatpush.msra.mxu0 0.0
        %306 = vmatpush.msra.mxu0 0.0
        %307 = vmatpush.msra.mxu0 0.0
        %308 = vmatpush.msra.mxu0 0.0
        %309 = vmatpush.msra.mxu0 %v255
        %310 = vmatpush.msra.mxu0 %v254
        %311 = vmatpush.msra.mxu0 %v253
        %312 = vmatpush.msra.mxu0 %v252
        %313 = vmatmul.f32.gmra.mxu0 %v286
        %v314 = vpop.f32.mrf.mxu0
        %v315 = vadd.f32 %v267, %v314
        %316 = vmatmul.f32.gmra.mxu0 %v289
        %v317 = vpop.f32.mrf.mxu0
        %v318 = vadd.f32 %v272, %v317
        %319 = vmatmul.f32.gmra.mxu0 %v292
        %v320 = vpop.f32.mrf.mxu0
        %v321 = vadd.f32 %v277, %v320
        %322 = vmatmul.f32.gmra.mxu0 %v295
        %v323 = vpop.f32.mrf.mxu0
        %v324 = vadd.f32 %v282, %v323
        %325 = vdwg.mxu0
        %v326 = vxor.u32 %v315, 2147483648
        %v327 = vxor.u32 %v318, 2147483648
        %v328 = vxor.u32 %v321, 2147483648
        %v329 = vxor.u32 %v324, 2147483648
        %v330 = vmul.f32 %v326, 1.442695
        %v331 = vpow.pop %v330
        %v332 = vmul.f32 %v327, 1.442695
        %v333 = vpow.pop %v332
        %v334 = vmul.f32 %v328, 1.442695
        %v335 = vpow.pop %v334
        %v336 = vmul.f32 %v329, 1.442695
        %v337 = vpow.pop %v336
        %v338 = vadd.f32 %v331, 1.0
        %v339 = vadd.f32 %v333, 1.0
        %v340 = vadd.f32 %v335, 1.0
        %v341 = vadd.f32 %v337, 1.0
        %v342 = vrcp.pop %v338
        %v343 = vmul.f32 %v338, %v342
        %v344 = vsub.f32 1.0, %v343
        %v345 = vmul.f32 %v342, %v344
        %v346 = vadd.f32 %v342, %v345
        %vm347 = vweird.f32 %v338
        %vm348 = vweird.f32 %v342
        %vm349 = vmor %vm347, %vm348
        %v350 = vsel %vm349, %v342, %v346
        %v351 = vand.u32 2147483647, %v338
        %vm352 = vcmp.eq.f32.partialorder %v351, 8.507059e+37
        %v353 = vand.u32 %v338, 2147483648
        %v354 = vor.u32 1.1754944e-38, %v353
        %v355 = vsel %vm352, %v354, %v350
        %v356 = vmul.f32 1.0, %v355
        %v357 = vrcp.pop %v339
        %v358 = vmul.f32 %v339, %v357
        %v359 = vsub.f32 1.0, %v358
        %v360 = vmul.f32 %v357, %v359
        %v361 = vadd.f32 %v357, %v360
        %vm362 = vweird.f32 %v339
        %vm363 = vweird.f32 %v357
        %vm364 = vmor %vm362, %vm363
        %v365 = vsel %vm364, %v357, %v361
        %v366 = vand.u32 2147483647, %v339
        %vm367 = vcmp.eq.f32.partialorder %v366, 8.507059e+37
        %v368 = vand.u32 %v339, 2147483648
        %v369 = vor.u32 1.1754944e-38, %v368
        %v370 = vsel %vm367, %v369, %v365
        %v371 = vmul.f32 1.0, %v370
        %v372 = vrcp.pop %v340
        %v373 = vmul.f32 %v340, %v372
        %v374 = vsub.f32 1.0, %v373
        %v375 = vmul.f32 %v372, %v374
        %v376 = vadd.f32 %v372, %v375
        %vm377 = vweird.f32 %v340
        %vm378 = vweird.f32 %v372
        %vm379 = vmor %vm377, %vm378
        %v380 = vsel %vm379, %v372, %v376
        %v381 = vand.u32 2147483647, %v340
        %vm382 = vcmp.eq.f32.partialorder %v381, 8.507059e+37
        %v383 = vand.u32 %v340, 2147483648
        %v384 = vor.u32 1.1754944e-38, %v383
        %v385 = vsel %vm382, %v384, %v380
        %v386 = vmul.f32 1.0, %v385
        %v387 = vrcp.pop %v341
        %v388 = vmul.f32 %v341, %v387
        %v389 = vsub.f32 1.0, %v388
        %v390 = vmul.f32 %v387, %v389
        %v391 = vadd.f32 %v387, %v390
        %vm392 = vweird.f32 %v341
        %vm393 = vweird.f32 %v387
        %vm394 = vmor %vm392, %vm393
        %v395 = vsel %vm394, %v387, %v391
        %v396 = vand.u32 2147483647, %v341
        %vm397 = vcmp.eq.f32.partialorder %v396, 8.507059e+37
        %v398 = vand.u32 %v341, 2147483648
        %v399 = vor.u32 1.1754944e-38, %v398
        %v400 = vsel %vm397, %v399, %v395
        %v401 = vmul.f32 1.0, %v400
        %v402 = vld [vmem:[#allocation5] sm:$0xff]
        %v403 = vld [vmem:[#allocation5 + $0x8] sm:$0xff]
        %v404 = vld [vmem:[#allocation5 + $0x10] sm:$0xff]
        %v405 = vld [vmem:[#allocation5 + $0x18] sm:$0xff]
        %v406 = vmul.f32 %v356, %v356
        %v407 = vmul.f32 %v371, %v371
        %v408 = vmul.f32 %v386, %v386
        %v409 = vmul.f32 %v401, %v401
        %v411 = vsel %vm284, %v402, 0
        %v414 = vsel %vm284, %v403, 0
        %v417 = vsel %vm284, %v404, 0
        %v420 = vsel %vm284, %v405, 0
        %422 = vmatpush.msra.mxu0 0.0
        %423 = vmatpush.msra.mxu0 0.0
        %424 = vmatpush.msra.mxu0 0.0
        %425 = vmatpush.msra.mxu0 0.0
        %426 = vmatpush.msra.mxu0 0.0
        %427 = vmatpush.msra.mxu0 0.0
        %428 = vmatpush.msra.mxu0 0.0
        %429 = vmatpush.msra.mxu0 0.0
        %430 = vmatpush.msra.mxu0 0.0
        %431 = vmatpush.msra.mxu0 0.0
        %432 = vmatpush.msra.mxu0 0.0
        %433 = vmatpush.msra.mxu0 0.0
        %434 = vmatpush.msra.mxu0 %v409
        %435 = vmatpush.msra.mxu0 %v408
        %436 = vmatpush.msra.mxu0 %v407
        %437 = vmatpush.msra.mxu0 %v406
        %438 = vmatmul.f32.gmra.mxu0 %v411
        %v439 = vpop.f32.mrf.mxu0
        %v440 = vadd.f32 0.0, %v439
        %441 = vmatmul.f32.gmra.mxu0 %v414
        %v442 = vpop.f32.mrf.mxu0
        %v443 = vadd.f32 0.0, %v442
        %444 = vmatmul.f32.gmra.mxu0 %v417
        %v445 = vpop.f32.mrf.mxu0
        %v446 = vadd.f32 0.0, %v445
        %447 = vmatmul.f32.gmra.mxu0 %v420
        %v448 = vpop.f32.mrf.mxu0
        %v449 = vadd.f32 0.0, %v448
        %450 = vdwg.mxu0
        %v451 = vrsqrt.pop %v440
        %v452 = vmul.f32 %v451, %v440
        %v453 = vmul.f32 %v452, %v451
        %v454 = vmul.f32 0.5, %v453
        %v455 = vsub.f32 1.5, %v454
        %v456 = vmul.f32 %v451, %v455
        %vm457 = vweird.f32 %v440
        %vm458 = vweird.f32 %v451
        %vm459 = vmor %vm457, %vm458
        %v460 = vsel %vm459, %v451, %v456
        %v461 = vrsqrt.pop %v443
        %v462 = vmul.f32 %v461, %v443
        %v463 = vmul.f32 %v462, %v461
        %v464 = vmul.f32 0.5, %v463
        %v465 = vsub.f32 1.5, %v464
        %v466 = vmul.f32 %v461, %v465
        %vm467 = vweird.f32 %v443
        %vm468 = vweird.f32 %v461
        %vm469 = vmor %vm467, %vm468
        %v470 = vsel %vm469, %v461, %v466
        %v471 = vrsqrt.pop %v446
        %v472 = vmul.f32 %v471, %v446
        %v473 = vmul.f32 %v472, %v471
        %v474 = vmul.f32 0.5, %v473
        %v475 = vsub.f32 1.5, %v474
        %v476 = vmul.f32 %v471, %v475
        %vm477 = vweird.f32 %v446
        %vm478 = vweird.f32 %v471
        %vm479 = vmor %vm477, %vm478
        %v480 = vsel %vm479, %v471, %v476
        %v481 = vrsqrt.pop %v449
        %v482 = vmul.f32 %v481, %v449
        %v483 = vmul.f32 %v482, %v481
        %v484 = vmul.f32 0.5, %v483
        %v485 = vsub.f32 1.5, %v484
        %v486 = vmul.f32 %v481, %v485
        %vm487 = vweird.f32 %v449
        %vm488 = vweird.f32 %v481
        %vm489 = vmor %vm487, %vm488
        %v490 = vsel %vm489, %v481, %v486
        %v491 = vmul.f32 %v356, %v460
        %v492 = vmul.f32 %v371, %v470
        %v493 = vmul.f32 %v386, %v480
        %v494 = vmul.f32 %v401, %v490
        %495 = vst [vmem:[%s251] sm:$0xff] %v491
        %496 = vst [vmem:[%s251 + $0x8] sm:$0xff] %v492
        %497 = vst [vmem:[%s251 + $0x10] sm:$0xff] %v493
        %498 = vst [vmem:[%s251 + $0x18] sm:$0xff] %v494
        %s499 = sand.u32 %s135, 1
        %s500 = scalar_lea.sflag [#allocation4], %s499
        %s501 = sand.u32 %s135, 1
        %s502 = smul.addr %s501, 32
        %s503 = scalar_lea.vmem [#allocation7], %s502
        // Predicated region
        $region45: #{tpu_custom_call.1} parent=35 // pred_check
          %p504 = pneg %p145
        $region46: #{tpu_custom_call.1} parent=35 // pred_check_branch
          %506 = sbr.rel (%p504) target = $region48
        $region47: #{tpu_custom_call.1} parent=35 // pred_region
          %508 = vsyncadd %s500, 0
          %s509 = smul.addr %s27, 8
          %s510 = sadd.s32 %s26, %s509
          %s511 = smul.addr %s510, 8
          %s512 = scalar_lea.hbm %s4, %s511
          %s513 = sshll.u32 %s503, 4
          %s514 = int_to_ptr.vmem [resolvable:$true] %s513
          %s515 = sshll.u32 %s512, 4
          %s516 = int_to_ptr.hbm [resolvable:$true] %s515
          %521 = dma.vmem_to_hbm [thread:$0]  %s514, 512, %s516, %s500, 128, 256, 8
        $region48: #{tpu_custom_call.1} parent=35 // pred_fallthru
          _
      $region36: #{tpu_custom_call.1} parent=5 // pred_fallthru
        _
      %p522 = scmp.le.s32.totalorder 2, %s17
      // Predicated region
      $region49: #{tpu_custom_call.1} parent=5 // pred_check
        %p523 = pneg %p522
      $region50: #{tpu_custom_call.1} parent=5 // pred_check_branch
        %525 = sbr.rel (%p523) target = $region52
      $region51: #{tpu_custom_call.1} parent=5 // pred_region
        %s526 = ssub.s32 %s17, 2
        // Predicated region
        $region53: #{tpu_custom_call.1} parent=51 // pred_check
          %p527 = pneg %p151
        $region54: #{tpu_custom_call.1} parent=51 // pred_check_branch
          %529 = sbr.rel (%p527) target = $region56
        $region55: #{tpu_custom_call.1} parent=51 // pred_region
          %s530 = sand.u32 %s136, 1
          %s531 = scalar_lea.sflag [#allocation4], %s530
          %s532 = sand.u32 %s136, 1
          %s533 = smul.addr %s532, 32
          %s534 = scalar_lea.vmem [#allocation7], %s533
          %536 = dma.done %s531, 512
        $region56: #{tpu_custom_call.1} parent=51 // pred_fallthru
          _
      $region52: #{tpu_custom_call.1} parent=5 // pred_fallthru
        _
    $region6: #{tpu_custom_call.1} parent=1 // loop_footer
      %s21 = sadd.s32 1, %s17
    $region7: #{tpu_custom_call.1} parent=1 // loop_footer_branch
      %16 = sbr.rel target = $region3
    $region8: #{tpu_custom_call.1} parent=1 // loop_exit
      _
    %537 = vsyncpa [#allocation3], 1
    %s538 = scalar_lea.sflag [#allocation3], 1
    %539 = vsyncpa %s538, 1
    %540 = vsyncpa [#allocation6], 1
    %541 = vsyncpa [#allocation4], 1
    %s542 = scalar_lea.sflag [#allocation4], 1
    %543 = vsyncpa %s542, 1

</llo_original>
